<compile_context>
chip_gen: v7x
topology: tpu7x:2x2x1
jax: 0.10.0
libtpu: 0.0.40
codegen_flags: <defaults>
</compile_context>

<pallas_src>
import functools

import jax
import jax.numpy as jnp
from jax.experimental import pallas as pl
from jax.experimental.pallas import tpu as pltpu


_VOCAB_ALIGN = 256  # MXU contracting-dim alignment for v6e / v7x (2x256x256).


def _embed_onehot_kernel(idx_ref, emb_ref, out_ref):
    # idx_ref: (TM, 1)   int32 token indices for this block (VMEM)
    # emb_ref: (Vpad, D) float32 embedding table (VMEM-resident, fetched once)
    # out_ref: (TM, D)   float32 gathered embeddings
    tm = idx_ref.shape[0]
    v_pad = emb_ref.shape[0]
    idx = idx_ref[...]                                            # (TM, 1)
    cols = jax.lax.broadcasted_iota(jnp.int32, (tm, v_pad), 1)    # (TM, Vpad)
    onehot = (cols == idx).astype(emb_ref.dtype)                  # (TM, Vpad)
    out_ref[...] = jnp.dot(
        onehot, emb_ref[...], preferred_element_type=jnp.float32
    ).astype(out_ref.dtype)


def prepare_embedding_table(embedding_table, align=_VOCAB_ALIGN):
    """Pad the vocab dim to a multiple of `align` ONCE at init.

    Keeps the per-forward hot path free of the V*D read+write padding pass.
    Padded rows are zero and are never selected (valid indices are < V).
    """
    V, _ = embedding_table.shape
    v_pad = pl.cdiv(V, align) * align
    if v_pad == V:
        return embedding_table
    return jnp.pad(embedding_table, ((0, v_pad - V), (0, 0)))


@functools.partial(jax.jit, static_argnames=("tm",))
def word2vec_forward(indices, emb_padded, *, tm=512):
    """Embedding lookup: indices (B, S) int -> (B, S, D) float32.

    `emb_padded` must already be vocab-padded (see prepare_embedding_table).
    """
    B, S = indices.shape
    v_pad, D = emb_padded.shape

    flat_idx = indices.reshape(-1).astype(jnp.int32)
    N = flat_idx.shape[0]

    # Big token tile to amortize per-grid-step overhead, clamped (8-aligned)
    # so tiny inputs don't compute hundreds of padded rows.
    tm_eff = min(tm, pl.cdiv(N, 8) * 8)
    n_pad = pl.cdiv(N, tm_eff) * tm_eff

    if n_pad != N:
        # Pad index 0 is a valid row; padded outputs are sliced off below.
        flat_idx = jnp.pad(flat_idx, (0, n_pad - N))
    idx2d = flat_idx.reshape(n_pad, 1)

    grid = (n_pad // tm_eff,)

    # VMEM budget (bytes): table single-buffered, idx/out double-buffered,
    # plus the (TM, Vpad) one-hot intermediate.
    vmem_needed = (
        v_pad * D * 4
        + 2 * tm_eff * 4
        + 2 * tm_eff * D * 4
        + tm_eff * v_pad * 4
    )
    # Only raise the scoped limit when we'd exceed the smallest default
    # (v5e: 16 MiB); cap below v7x's 64 MiB physical VMEM (headroom).
    vmem_limit = None
    if vmem_needed > 12 * 1024 * 1024:
        vmem_limit = min(int(vmem_needed * 3 // 2), 48 * 1024 * 1024)

    grid_spec = pltpu.PrefetchScalarGridSpec(
        num_scalar_prefetch=0,
        grid=grid,
        in_specs=[
            # TM indices per step; last dim equals the full array dim (1).
            pl.BlockSpec((tm_eff, 1), lambda i: (i, 0)),
            # Whole table, constant block index -> DMA'd from HBM once and
            # kept VMEM-resident; single-buffered since it never changes.
            pl.BlockSpec(
                (v_pad, D),
                lambda i: (0, 0),
                pipeline_mode=pl.Buffered(1),
            ),
        ],
        # Lane-dense, sublane-aligned output tile: full (8,128) stores.
        out_specs=pl.BlockSpec((tm_eff, D), lambda i: (i, 0)),
    )

    out_flat = pl.pallas_call(
        _embed_onehot_kernel,
        out_shape=jax.ShapeDtypeStruct((n_pad, D), emb_padded.dtype),
        grid_spec=grid_spec,
        compiler_params=pltpu.CompilerParams(
            # Disjoint output blocks per step, no carried state -> parallel
            # (lets v7x shard token blocks across its 2 TensorCores when
            # there is more than one block).
            dimension_semantics=("parallel",),
            vmem_limit_bytes=vmem_limit,
        ),
    )(idx2d, emb_padded)

    # Skip the extra output pass entirely when N is already tile-aligned.
    if n_pad != N:
        out_flat = out_flat[:N]
    return out_flat.reshape(B, S, D)


if __name__ == "__main__":
    # Small, deterministic setup consistent with Word2VecModel(vocab, dim).
    vocab_size = 64
    embedding_dim = 128
    batch, seq = 2, 8

    key = jax.random.PRNGKey(0)
    k_emb, k_idx = jax.random.split(key)

    # nn.Embedding default init: weights ~ N(0, 1)
    embedding_table = jax.random.normal(
        k_emb, (vocab_size, embedding_dim), dtype=jnp.float32
    )
    inputs = jax.random.randint(
        k_idx, (batch, seq), minval=0, maxval=vocab_size, dtype=jnp.int32
    )

    # Vocab padding done once, outside the forward hot path.
    emb_padded = prepare_embedding_table(embedding_table)

    out = word2vec_forward(inputs, emb_padded)
    out = jax.block_until_ready(out)

    # Correctness check against plain-JAX reference (same as torch embedding).
    ref = embedding_table[inputs]
    assert out.shape == (batch, seq, embedding_dim)
    assert jnp.allclose(out, ref), "Pallas embedding lookup mismatch"

    print("KERNEL_OK")
</pallas_src>

<mosaic_0001>
module attributes {stable_mosaic.version = 11 : i64} {
  func.func @_embed_onehot_kernel(%arg0: i32, %arg1: memref<16x1xi32, #tpu.memory_space<vmem>>, %arg2: memref<256x128xf32, #tpu.memory_space<vmem>>, %arg3: memref<16x128xf32, #tpu.memory_space<vmem>>) attributes {dimension_semantics = [#tpu.dimension_semantics<parallel>], iteration_bounds = array<i64: 1>, scalar_prefetch = 0 : i64, scratch_operands = 0 : i64, tpu.core_type = #tpu.core_type<tc>, window_params = [{transform_indices = @transform_0, window_bounds = array<i64: 16, 1>}, {pipeline_mode = #tpu.pipeline_mode<synchronous>, transform_indices = @transform_1, window_bounds = array<i64: 256, 128>}, {transform_indices = @transform_2, window_bounds = array<i64: 16, 128>}]} {
    %c0 = arith.constant 0 : index
    %c0_0 = arith.constant 0 : index
    %0 = vector.load %arg1[%c0, %c0_0] : memref<16x1xi32, #tpu.memory_space<vmem>>, vector<16x1xi32>
    %1 = tpu.iota {dimensions = array<i32: 1>} : vector<16x256xi32>
    %2 = vector.broadcast %0 : vector<16x1xi32> to vector<16x256xi32>
    %3 = arith.cmpi eq, %1, %2 : vector<16x256xi32>
    %4 = arith.extui %3 : vector<16x256xi1> to vector<16x256xi32>
    %5 = arith.sitofp %4 : vector<16x256xi32> to vector<16x256xf32>
    %c0_1 = arith.constant 0 : index
    %c0_2 = arith.constant 0 : index
    %6 = vector.load %arg2[%c0_1, %c0_2] : memref<256x128xf32, #tpu.memory_space<vmem>>, vector<256x128xf32>
    %cst = arith.constant dense<0.000000e+00> : vector<16x128xf32>
    %7 = tpu.matmul %5, %6, %cst {dimension_numbers = #tpu.dot_dimension_numbers<[1], [0], [0], [1], [0, 0, 1, 1], [], []>} : vector<16x256xf32>, vector<256x128xf32>, vector<16x128xf32> -> vector<16x128xf32>
    %c0_3 = arith.constant 0 : index
    %c0_4 = arith.constant 0 : index
    %8 = vector.load %arg3[%c0_3, %c0_4] : memref<16x128xf32, #tpu.memory_space<vmem>>, vector<16x128xf32>
    tpu.vector_store %arg3[%c0_3, %c0_4], %7 {strides = array<i32>} : memref<16x128xf32, #tpu.memory_space<vmem>>, vector<16x128xf32>,
    return
  }
  func.func @transform_0(%arg0: i32) -> (i32, i32) {
    %c0_i32 = arith.constant 0 : i32
    %c0_i32_0 = arith.constant 0 : i32
    return %arg0, %c0_i32 : i32, i32
  }
  func.func @transform_1(%arg0: i32) -> (i32, i32) {
    %c0_i32 = arith.constant 0 : i32
    %c0_i32_0 = arith.constant 0 : i32
    %c0_i32_1 = arith.constant 0 : i32
    return %c0_i32, %c0_i32_0 : i32, i32
  }
  func.func @transform_2(%arg0: i32) -> (i32, i32) {
    %c0_i32 = arith.constant 0 : i32
    %c0_i32_0 = arith.constant 0 : i32
    return %arg0, %c0_i32 : i32, i32
  }
}

</mosaic_0001>

<llo_original>
// kernel: word2vec_forward.1
$region0: #{word2vec_forward.1}
  #allocation0 [shape = 'u32[]', space=smem, size = 0x4, offset = 0x4, fixed_abs, tag = 'smem constant byte address 0x4 - core index']
  #allocation1 [shape = 'u32[144,128]{1,0:T(1,128)}', space=vmem, size = 0x12000, scoped, tag = 'internal scratch']
  %s0 = inlined_call_operand.vmem [shape: s32[16,1], index: 0, kind: input, shape index: {}]
  %s1 = inlined_call_operand.hbm [shape: f32[256,128], index: 1, kind: input, shape index: {}]
  %s2 = inlined_call_operand.hbm [shape: f32[16,128], index: 2, kind: output, shape index: {}]
  %s3 = sld [smem:[#allocation0]]
  $region22: #{word2vec_forward.1} parent=0
    _
  %s5 = ssub.s32 1, %s3
  %s6 = scalar_select 0, %s5, %s3
  $region1: #{word2vec_forward.1} parent=0
    #allocation2 [shape = 'u8[131072]{0}', space=vmem, size = 0x20000, scoped, tag = 'input window, operand 1, single buffered']
    #allocation3 [shape = 's32[1]{0}', space=sflag, size = 0x4, scoped, tag = 'scoped memory for word2vec_forward.1']
    #allocation4 [shape = 's32[1]{0}', space=sflag, size = 0x4, scoped, tag = 'scoped memory for word2vec_forward.1']
    #allocation5 [shape = 'u8[8192]{0}', space=vmem, size = 0x2000, scoped, tag = 'output window, operand 0, single buffered']
    %7 = vsyncpa [#allocation3], 0
    %8 = vsyncpa [#allocation4], 0
    // Predicated region
    $region2: #{word2vec_forward.1} parent=1 // pred_check
      _
    $region3: #{word2vec_forward.1} parent=1 // pred_check_branch
      %10 = sbr.rel (0) target = $region5
    $region4: #{word2vec_forward.1} parent=1 // pred_region
      _
    $region5: #{word2vec_forward.1} parent=1 // pred_fallthru
      _
    // Predicated region
    $region6: #{word2vec_forward.1} parent=1 // pred_check
      _
    $region7: #{word2vec_forward.1} parent=1 // pred_check_branch
      %12 = sbr.rel (0) target = $region9
    $region8: #{word2vec_forward.1} parent=1 // pred_region
      %s14 = ssub.s32 4096, 4096
      %15 = vsyncadd [#allocation3], %s14
      %s16 = sshll.u32 [#allocation2], 4
      %s17 = int_to_ptr.vmem [resolvable:$true] %s16
      %22 = dma.hbm_to_vmem [thread:$0]  %s1, 4096, %s17, [#allocation3], 128, 128, 8
    $region9: #{word2vec_forward.1} parent=1 // pred_fallthru
      _
    // Predicated region
    $region10: #{word2vec_forward.1} parent=1 // pred_check
      _
    $region11: #{word2vec_forward.1} parent=1 // pred_check_branch
      %24 = sbr.rel (0) target = $region13
    $region12: #{word2vec_forward.1} parent=1 // pred_region
      %25 = dma.done [#allocation3], 4096
    $region13: #{word2vec_forward.1} parent=1 // pred_fallthru
      _
    %v26 = vld [vmem:[%s0] sm:$0xff]
    %v27 = vld [vmem:[%s0 + $0x8] sm:$0xff]
    %v28 = vlaneseq
    %v29 = vand.u32 %v28, 127
    %v30 = vadd.s32 %v29, 128
    %31 = vset.pattern.permute.xlu0 0
    %32 = vperm.xlu0 %31, %v26
    %v33 = vpop.permute.xlu0 %32
    %34 = vset.pattern.permute.xlu0 0
    %35 = vperm.xlu0 %34, %v27
    %v36 = vpop.permute.xlu0 %35
    %vm37 = vcmp.eq.s32.totalorder %v29, %v33
    %vm38 = vcmp.eq.s32.totalorder %v30, %v33
    %vm39 = vcmp.eq.s32.totalorder %v29, %v36
    %vm40 = vcmp.eq.s32.totalorder %v30, %v36
    %v41 = vsel %vm37, 1, 0
    %v42 = vsel %vm38, 1, 0
    %v43 = vsel %vm39, 1, 0
    %v44 = vsel %vm40, 1, 0
    %v45 = vcvt.s32.f32 %v41
    %v46 = vcvt.s32.f32 %v42
    %v47 = vcvt.s32.f32 %v43
    %v48 = vcvt.s32.f32 %v44
    %v49 = vld [vmem:[#allocation2] sm:$0xff]
    %v50 = vld [vmem:[#allocation2 + $0x8] sm:$0xff]
    %v51 = vld [vmem:[#allocation2 + $0x10] sm:$0xff]
    %v52 = vld [vmem:[#allocation2 + $0x18] sm:$0xff]
    %v53 = vld [vmem:[#allocation2 + $0x20] sm:$0xff]
    %v54 = vld [vmem:[#allocation2 + $0x28] sm:$0xff]
    %v55 = vld [vmem:[#allocation2 + $0x30] sm:$0xff]
    %v56 = vld [vmem:[#allocation2 + $0x38] sm:$0xff]
    %v57 = vld [vmem:[#allocation2 + $0x40] sm:$0xff]
    %v58 = vld [vmem:[#allocation2 + $0x48] sm:$0xff]
    %v59 = vld [vmem:[#allocation2 + $0x50] sm:$0xff]
    %v60 = vld [vmem:[#allocation2 + $0x58] sm:$0xff]
    %v61 = vld [vmem:[#allocation2 + $0x60] sm:$0xff]
    %v62 = vld [vmem:[#allocation2 + $0x68] sm:$0xff]
    %v63 = vld [vmem:[#allocation2 + $0x70] sm:$0xff]
    %v64 = vld [vmem:[#allocation2 + $0x78] sm:$0xff]
    %v65 = vld [vmem:[#allocation2 + $0x80] sm:$0xff]
    %v66 = vld [vmem:[#allocation2 + $0x88] sm:$0xff]
    %v67 = vld [vmem:[#allocation2 + $0x90] sm:$0xff]
    %v68 = vld [vmem:[#allocation2 + $0x98] sm:$0xff]
    %v69 = vld [vmem:[#allocation2 + $0xa0] sm:$0xff]
    %v70 = vld [vmem:[#allocation2 + $0xa8] sm:$0xff]
    %v71 = vld [vmem:[#allocation2 + $0xb0] sm:$0xff]
    %v72 = vld [vmem:[#allocation2 + $0xb8] sm:$0xff]
    %v73 = vld [vmem:[#allocation2 + $0xc0] sm:$0xff]
    %v74 = vld [vmem:[#allocation2 + $0xc8] sm:$0xff]
    %v75 = vld [vmem:[#allocation2 + $0xd0] sm:$0xff]
    %v76 = vld [vmem:[#allocation2 + $0xd8] sm:$0xff]
    %v77 = vld [vmem:[#allocation2 + $0xe0] sm:$0xff]
    %v78 = vld [vmem:[#allocation2 + $0xe8] sm:$0xff]
    %v79 = vld [vmem:[#allocation2 + $0xf0] sm:$0xff]
    %v80 = vld [vmem:[#allocation2 + $0xf8] sm:$0xff]
    %81 = vmatprep.subr.mxu0 0.0
    %82 = vmatpush1.msra.mxu0 %v49
    %83 = vmatprep.subr.mxu0 0.0
    %84 = vmatpush1.msra.mxu0 %v50
    %85 = vmatprep.subr.mxu0 0.0
    %86 = vmatpush1.msra.mxu0 %v51
    %87 = vmatprep.subr.mxu0 0.0
    %88 = vmatpush1.msra.mxu0 %v52
    %89 = vmatprep.subr.mxu0 0.0
    %90 = vmatpush1.msra.mxu0 %v53
    %91 = vmatprep.subr.mxu0 0.0
    %92 = vmatpush1.msra.mxu0 %v54
    %93 = vmatprep.subr.mxu0 0.0
    %94 = vmatpush1.msra.mxu0 %v55
    %95 = vmatprep.subr.mxu0 0.0
    %96 = vmatpush1.msra.mxu0 %v56
    %97 = vmatprep.subr.mxu0 0.0
    %98 = vmatpush1.msra.mxu0 %v57
    %99 = vmatprep.subr.mxu0 0.0
    %100 = vmatpush1.msra.mxu0 %v58
    %101 = vmatprep.subr.mxu0 0.0
    %102 = vmatpush1.msra.mxu0 %v59
    %103 = vmatprep.subr.mxu0 0.0
    %104 = vmatpush1.msra.mxu0 %v60
    %105 = vmatprep.subr.mxu0 0.0
    %106 = vmatpush1.msra.mxu0 %v61
    %107 = vmatprep.subr.mxu0 0.0
    %108 = vmatpush1.msra.mxu0 %v62
    %109 = vmatprep.subr.mxu0 0.0
    %110 = vmatpush1.msra.mxu0 %v63
    %111 = vmatprep.subr.mxu0 0.0
    %112 = vmatpush1.msra.mxu0 %v64
    %113 = vmatprep.subr.mxu0 0.0
    %114 = vmatpush1.msra.mxu0 %v65
    %115 = vmatprep.subr.mxu0 0.0
    %116 = vmatpush1.msra.mxu0 %v66
    %117 = vmatprep.subr.mxu0 0.0
    %118 = vmatpush1.msra.mxu0 %v67
    %119 = vmatprep.subr.mxu0 0.0
    %120 = vmatpush1.msra.mxu0 %v68
    %121 = vmatprep.subr.mxu0 0.0
    %122 = vmatpush1.msra.mxu0 %v69
    %123 = vmatprep.subr.mxu0 0.0
    %124 = vmatpush1.msra.mxu0 %v70
    %125 = vmatprep.subr.mxu0 0.0
    %126 = vmatpush1.msra.mxu0 %v71
    %127 = vmatprep.subr.mxu0 0.0
    %128 = vmatpush1.msra.mxu0 %v72
    %129 = vmatprep.subr.mxu0 0.0
    %130 = vmatpush1.msra.mxu0 %v73
    %131 = vmatprep.subr.mxu0 0.0
    %132 = vmatpush1.msra.mxu0 %v74
    %133 = vmatprep.subr.mxu0 0.0
    %134 = vmatpush1.msra.mxu0 %v75
    %135 = vmatprep.subr.mxu0 0.0
    %136 = vmatpush1.msra.mxu0 %v76
    %137 = vmatprep.subr.mxu0 0.0
    %138 = vmatpush1.msra.mxu0 %v77
    %139 = vmatprep.subr.mxu0 0.0
    %140 = vmatpush1.msra.mxu0 %v78
    %141 = vmatprep.subr.mxu0 0.0
    %142 = vmatpush1.msra.mxu0 %v79
    %143 = vmatprep.subr.mxu0 0.0
    %144 = vmatpush1.msra.mxu0 %v80
    %145 = vmatprep.mubr.f32.mxu0 %v46
    %146 = vmatmul.mubr.f32.gmra.mrb[0].mxu0 %v45
    %v147 = vpop.f32.mrb[0].mxu0
    %v148 = vadd.f32 0.0, %v147
    %v149 = vpop.f32.mrb[0].mxu0
    %150 = vmatprep.mubr.f32.mxu0 %v48
    %151 = vmatmul.mubr.f32.gmra.mrb[0].mxu0 %v47
    %v152 = vpop.f32.mrb[0].mxu0
    %v153 = vadd.f32 0.0, %v152
    %v154 = vpop.f32.mrb[0].mxu0
    %155 = vdwg.mxu0
    %156 = vst [vmem:[#allocation5] sm:$0xff] %v148
    %157 = vst [vmem:[#allocation5 + $0x8] sm:$0xff] %v153
    // Predicated region
    $region14: #{word2vec_forward.1} parent=1 // pred_check
      _
    $region15: #{word2vec_forward.1} parent=1 // pred_check_branch
      %159 = sbr.rel (0) target = $region17
    $region16: #{word2vec_forward.1} parent=1 // pred_region
      %s161 = ssub.s32 256, 256
      %162 = vsyncadd [#allocation4], %s161
      %s163 = sshll.u32 [#allocation5], 4
      %s164 = int_to_ptr.vmem [resolvable:$true] %s163
      %169 = dma.vmem_to_hbm [thread:$0]  %s164, 256, %s2, [#allocation4], 128, 128, 8
    $region17: #{word2vec_forward.1} parent=1 // pred_fallthru
      _
    // Predicated region
    $region18: #{word2vec_forward.1} parent=1 // pred_check
      _
    $region19: #{word2vec_forward.1} parent=1 // pred_check_branch
      %171 = sbr.rel (0) target = $region21
    $region20: #{word2vec_forward.1} parent=1 // pred_region
      %172 = dma.done [#allocation4], 256
    $region21: #{word2vec_forward.1} parent=1 // pred_fallthru
      _
    %173 = vsyncpa [#allocation3], 1
    %174 = vsyncpa [#allocation4], 1

</llo_original>
